<compile_context>
chip_gen: v7x
topology: tpu7x:2x2x1
jax: 0.10.0
libtpu: 0.0.40
codegen_flags: <defaults>
</compile_context>

<pallas_src>
import functools

import jax
import jax.numpy as jnp
from jax.experimental import pallas as pl
from jax.experimental.pallas import tpu as pltpu


def _hbm_copy_kernel(x_hbm, o_hbm, sems, *, chunks):
    """Direct HBM->HBM copy of an (R, C) slab via len(chunks) outstanding DMAs.

    `chunks` is a static tuple of (row_start, row_count) pairs, so all slices
    below are static and the loop is fully unrolled at trace time.
    """
    copies = []
    for idx, (start, size) in enumerate(chunks):
        cp = pltpu.make_async_copy(
            x_hbm.at[pl.ds(start, size)],
            o_hbm.at[pl.ds(start, size)],
            sems.at[idx],
        )
        cp.start()
        copies.append(cp)
    # All DMAs are in flight; now drain them.
    for cp in copies:
        cp.wait()


def _pick_slab_width(total):
    """Largest lane-dense width (multiple of 128, capped at 32768) dividing total."""
    for c in (32768, 16384, 8192, 4096, 2048, 1024, 512, 256, 128):
        if c <= total and total % c == 0:
            return c
    return total  # tiny / odd sizes: single-row slab (still a legal DMA)


def _make_chunks(rows, max_chunks=4):
    """Split `rows` into up to `max_chunks` contiguous (start, size) chunks."""
    n = min(max_chunks, rows)
    base, rem = divmod(rows, n)
    chunks, start = [], 0
    for i in range(n):
        size = base + (1 if i < rem else 0)
        chunks.append((start, size))
        start += size
    return tuple(chunks)


def lambda_layer(x):
    """Pallas implementation of LambdaLayer(lambda x: x.view(x.size(0), -1))."""
    B = x.shape[0]
    N = 1
    for d in x.shape[1:]:
        N *= d
    total = B * N

    # Free metadata reshape — this IS the lambda.  View the flat buffer as a
    # row-major slab (R, C) purely so the copy can be chunked into a few
    # contiguous pieces; the DMA itself does not care about lane layout.
    C = _pick_slab_width(total)
    R = total // C
    x_slab = jnp.reshape(x, (R, C))

    chunks = _make_chunks(R, max_chunks=4)

    out_slab = pl.pallas_call(
        functools.partial(_hbm_copy_kernel, chunks=chunks),
        in_specs=[pl.BlockSpec(memory_space=pl.ANY)],
        out_specs=pl.BlockSpec(memory_space=pl.ANY),
        out_shape=jax.ShapeDtypeStruct((R, C), x.dtype),
        scratch_shapes=[pltpu.SemaphoreType.DMA((len(chunks),))],
    )(x_slab)

    # Free metadata reshape of the contiguous slab back to the flatten shape.
    return jnp.reshape(out_slab, (B, N))


if __name__ == "__main__":
    # Small, deterministic example input consistent with an NCHW conv feature map.
    key = jax.random.PRNGKey(0)
    B, C, H, W = 2, 4, 16, 16
    x = jax.random.normal(key, (B, C, H, W), dtype=jnp.float32)

    out = lambda_layer(x)
    out = jax.block_until_ready(out)

    # Reference: exactly what the PyTorch lambda does (row-major flatten).
    ref = jnp.reshape(x, (B, C * H * W))
    assert out.shape == (B, C * H * W)
    assert out.dtype == x.dtype
    assert jnp.array_equal(out, ref), "Pallas flatten does not match reference"

    print("KERNEL_OK")
</pallas_src>

<mosaic_0001>
module attributes {stable_mosaic.version = 11 : i64} {
  func.func @_hbm_copy_kernel(%arg0: memref<1x2048xf32, #tpu.memory_space<any>>, %arg1: memref<1x2048xf32, #tpu.memory_space<any>>, %arg2: memref<1x!tpu.dma_semaphore, #tpu.memory_space<semaphore_mem>>) attributes {dimension_semantics = [], scalar_prefetch = 0 : i64, scratch_operands = 1 : i64, tpu.core_type = #tpu.core_type<tc>} {
    %c0_i32 = arith.constant 0 : i32
    %c0_i32_0 = arith.constant 0 : i32
    %c0_i32_1 = arith.constant 0 : i32
    %0 = tpu.memref_slice %arg0[%c0_i32_0, %c0_i32_1] : memref<1x2048xf32, #tpu.memory_space<any>> -> memref<1x2048xf32, #tpu.memory_space<any>>
    %c0_i32_2 = arith.constant 0 : i32
    %c0_i32_3 = arith.constant 0 : i32
    %1 = tpu.memref_slice %arg1[%c0_i32_2, %c0_i32_3] : memref<1x2048xf32, #tpu.memory_space<any>> -> memref<1x2048xf32, #tpu.memory_space<any>>
    %2 = tpu.memref_slice %arg2[%c0_i32] : memref<1x!tpu.dma_semaphore, #tpu.memory_space<semaphore_mem>> -> memref<1x!tpu.dma_semaphore, #tpu.memory_space<semaphore_mem>>
    %3 = tpu.memref_squeeze %2 : memref<1x!tpu.dma_semaphore, #tpu.memory_space<semaphore_mem>> -> memref<!tpu.dma_semaphore, #tpu.memory_space<semaphore_mem>>
    tpu.enqueue_dma source(%0 : memref<1x2048xf32, #tpu.memory_space<any>>) target(%1 : memref<1x2048xf32, #tpu.memory_space<any>>) target_semaphore(%3 : memref<!tpu.dma_semaphore, #tpu.memory_space<semaphore_mem>>)
    %c0_i32_4 = arith.constant 0 : i32
    %c0_i32_5 = arith.constant 0 : i32
    %c0_i32_6 = arith.constant 0 : i32
    %4 = tpu.memref_slice %arg0[%c0_i32_5, %c0_i32_6] : memref<1x2048xf32, #tpu.memory_space<any>> -> memref<1x2048xf32, #tpu.memory_space<any>>
    %c0_i32_7 = arith.constant 0 : i32
    %c0_i32_8 = arith.constant 0 : i32
    %5 = tpu.memref_slice %arg1[%c0_i32_7, %c0_i32_8] : memref<1x2048xf32, #tpu.memory_space<any>> -> memref<1x2048xf32, #tpu.memory_space<any>>
    %6 = tpu.memref_slice %arg2[%c0_i32_4] : memref<1x!tpu.dma_semaphore, #tpu.memory_space<semaphore_mem>> -> memref<1x!tpu.dma_semaphore, #tpu.memory_space<semaphore_mem>>
    %7 = tpu.memref_squeeze %6 : memref<1x!tpu.dma_semaphore, #tpu.memory_space<semaphore_mem>> -> memref<!tpu.dma_semaphore, #tpu.memory_space<semaphore_mem>>
    tpu.wait_dma2 semaphore(%7 : memref<!tpu.dma_semaphore, #tpu.memory_space<semaphore_mem>>) src(%4 : memref<1x2048xf32, #tpu.memory_space<any>>) dst(%5 : memref<1x2048xf32, #tpu.memory_space<any>>)
    return
  }
}

</mosaic_0001>

<llo_original>
// kernel: tpu_custom_call.1
$region0: #{tpu_custom_call.1}
  #allocation0 [shape = 'u32[]', space=smem, size = 0x4, offset = 0x4, fixed_abs, tag = 'smem constant byte address 0x4 - core index']
  #allocation1 [shape = 'u32[144,128]{1,0:T(1,128)}', space=vmem, size = 0x12000, scoped, tag = 'internal scratch']
  #allocation2 [shape = 's32[1]{0}', space=sflag, size = 0x4, scoped, tag = 'scratch operand']
  #allocation3 [shape = 's32[]', space=sflag, size = 0x4, offset = 0, fixed_abs, tag = 'sflag constant byte address 0x0 - dummy sync flag']
  #allocation4 [shape = 'u32[0]{0}', space=smem, size = 0, offset = 0, fixed_abs, tag = 'smem constant byte address 0x0 - null']
  %s0 = inlined_call_operand.hbm [shape: f32[1,2048], index: 0, kind: input, shape index: {}]
  %s1 = inlined_call_operand.hbm [shape: f32[1,2048], index: 1, kind: output, shape index: {}]
  %s2 = sld [smem:[#allocation0]]
  $region2: #{tpu_custom_call.1} parent=0
    _
  %s4 = ssub.s32 1, %s2
  %s5 = scalar_select 0, %s4, %s2
  %s7 = sshll.u32 1, 14
  %s8 = sxor.u32 4294967295, %s7
  %s11 = sshll.u32 3, 24
  %s12 = sxor.u32 4294967295, %s11
  %s13 = sand.u32 0, %s12
  %s15 = sor.u32 %s13, 0
  %18 = dma.general %s0, 256, %s1, [#allocation2], [#allocation3], [#allocation4], %s15, 0
  %s19 = smul.u32 1, 16
  %s20 = sshll.u32 %s19, 4
  %21 = dma.done [#allocation2], %s20
  %22 = vsyncmov [#allocation2]
  %s23 = vpop.sfrf %22
  %p24 = scmp.eq.s32.totalorder %s23, 0
  %p25 = pneg %p24
  %27 = shalt.err (%p25)

</llo_original>
